<compile_context>
chip_gen: v7x
topology: tpu7x:2x2x1
jax: 0.10.0
libtpu: 0.0.40
codegen_flags: <defaults>
</compile_context>

<pallas_src>
import functools

import jax
import jax.numpy as jnp
from jax.experimental import pallas as pl
from jax.experimental.pallas import tpu as pltpu

HIDDEN = 100          # ELM hidden width fixed by the module (ELM(100, 100, num_classes))
LANE = 128
ROW_ALIGN = 16        # bf16 packs 16 rows per sublane group


def _round_up(x, m):
    return (x + m - 1) // m * m


# ----------------------------- Pallas kernel --------------------------------
def _feature_extractor_kernel(
    x_ref,        # [TB, D_in]   f32 input tile (cast to bf16 in-kernel)
    wg_ref,       # [D_in, HP]   bf16 gfe.forwardToHidden weight (pre-transposed, lane-padded)
    bg_ref,       # [1, HP]      f32 bias (zero in padded lanes)
    wa_ref,       # [HP, HP]     bf16 ELM alpha weight (zero in padded rows/cols)
    ba_ref,       # [1, HP]      f32 bias
    wb_ref,       # [HP, CP]     bf16 ELM beta weight (zero in padded rows/cols)
    bb_ref,       # [1, CP]      f32 bias
    out_ref,      # [TB, CP]     bf16 logits tile (lane-dense, unmasked stores)
):
    # sigmoid(t) == 0.5 * (1 + tanh(t / 2)): one EUP transcendental per element.
    def _sigmoid(t):
        return 0.5 * (1.0 + jnp.tanh(0.5 * t))

    x = x_ref[...].astype(jnp.bfloat16)                                # cast in-kernel

    # gfe.forwardToHidden: Linear(D_in -> 100) + sigmoid (f32 accumulate / activation)
    h0 = jnp.dot(x, wg_ref[...], preferred_element_type=jnp.float32) + bg_ref[...]
    h0 = _sigmoid(h0)

    # ELM hidden layer: Linear(100 -> 100) + sigmoid
    h1 = jnp.dot(h0.astype(jnp.bfloat16), wa_ref[...],
                 preferred_element_type=jnp.float32) + ba_ref[...]
    h1 = _sigmoid(h1)

    # ELM output layer: Linear(100 -> num_classes)
    y = jnp.dot(h1.astype(jnp.bfloat16), wb_ref[...],
                preferred_element_type=jnp.float32) + bb_ref[...]

    out_ref[...] = y.astype(jnp.bfloat16)                              # bf16, 128-lane slab


# --------------------------------- wrapper -----------------------------------
@functools.partial(jax.jit, static_argnames=("num_classes",))
def feature_extractor_forward(x, params, *, num_classes):
    """Fused forward pass. x: [B, D_in] float32. Returns [B, num_classes] float32."""
    wg, bg, wa, ba, wb, bb = (
        params["wg"], params["bg"], params["wa"],
        params["ba"], params["wb"], params["bb"],
    )
    B, D_in = x.shape
    CP = wb.shape[1]                                  # lane-padded class dim

    # ---- batch tiling: large tiles (VMEM-budgeted), minimal padding, >=2 tiles for v7x ----
    bytes_per_row = D_in * 4 + CP * 2                 # f32 x row + bf16 out row
    tb_budget = max(ROW_ALIGN, ((8 << 20) // bytes_per_row) // ROW_ALIGN * ROW_ALIGN)
    tb_max = min(4096, tb_budget)

    n_tiles = pl.cdiv(B, tb_max)
    if B >= 2 * ROW_ALIGN:
        n_tiles = max(n_tiles, 2)                     # keep both v7x TensorCores busy
    TB = _round_up(pl.cdiv(B, n_tiles), ROW_ALIGN)
    Bp = _round_up(B, TB)

    xk = x
    if Bp != B:
        xk = jnp.pad(xk, ((0, Bp - B), (0, 0)))       # f32 pad rows, sliced off below

    grid = (Bp // TB,)
    resident = lambda a: pl.BlockSpec(a.shape, lambda i: (0, 0))

    out = pl.pallas_call(
        _feature_extractor_kernel,
        out_shape=jax.ShapeDtypeStruct((Bp, CP), jnp.bfloat16),
        grid=grid,
        in_specs=[
            pl.BlockSpec((TB, D_in), lambda i: (i, 0)),   # x: tiled over batch
            resident(wg), resident(bg),
            resident(wa), resident(ba),
            resident(wb), resident(bb),
        ],
        out_specs=pl.BlockSpec((TB, CP), lambda i: (i, 0)),
        compiler_params=pltpu.CompilerParams(
            dimension_semantics=("parallel",),            # shard batch across TCs on v7x
        ),
    )(xk, wg, bg, wa, ba, wb, bb)

    return out[:B, :num_classes].astype(jnp.float32)


# ------------------------- deterministic param init -------------------------
def init_params(key, d_in, hidden, num_classes):
    """nn.Linear-style init, then zero-pad to lane-dense (128-wide) bf16 weight slabs."""
    k = jax.random.split(key, 6)

    def lin(kw, kb, fan_in, fan_out):
        bound = 1.0 / jnp.sqrt(fan_in)
        w = jax.random.uniform(kw, (fan_in, fan_out), jnp.float32, -bound, bound)
        b = jax.random.uniform(kb, (1, fan_out), jnp.float32, -bound, bound)
        return w, b

    wg, bg = lin(k[0], k[1], d_in, hidden)          # gfe.forwardToHidden head
    wa, ba = lin(k[2], k[3], hidden, hidden)        # ELM alpha (100 -> 100)
    wb, bb = lin(k[4], k[5], hidden, num_classes)   # ELM beta  (100 -> num_classes)

    hp = _round_up(hidden, LANE)
    cp = _round_up(num_classes, LANE)

    # Zero padding everywhere: padded hidden lanes become sigmoid(0)=0.5 but the padded
    # *rows* of the downstream weights are zero, so nothing leaks into real outputs.
    def pad2(w, r, c):
        return jnp.pad(w, ((0, r - w.shape[0]), (0, c - w.shape[1])))

    padded = dict(
        wg=pad2(wg, d_in, hp).astype(jnp.bfloat16),
        bg=pad2(bg, 1, hp),                                   # f32
        wa=pad2(wa, hp, hp).astype(jnp.bfloat16),
        ba=pad2(ba, 1, hp),                                   # f32
        wb=pad2(wb, hp, cp).astype(jnp.bfloat16),
        bb=pad2(bb, 1, cp),                                   # f32
    )
    raw = dict(wg=wg, bg=bg, wa=wa, ba=ba, wb=wb, bb=bb)      # for the f32 reference
    return padded, raw


# --------------------------------- main --------------------------------------
if __name__ == "__main__":
    B, D_IN, NUM_CLASSES = 8, 32, 8

    key = jax.random.PRNGKey(0)
    kx, kp = jax.random.split(key)
    x = jax.random.normal(kx, (B, D_IN), jnp.float32)
    params, raw = init_params(kp, D_IN, HIDDEN, NUM_CLASSES)

    out = feature_extractor_forward(x, params, num_classes=NUM_CLASSES)
    out = jax.block_until_ready(out)
    assert out.shape == (B, NUM_CLASSES)

    # Reference 1: same bf16-in / f32-accumulate / tanh-sigmoid math on the padded params
    # (kernel additionally rounds the final logits to bf16, hence the 2e-2 tolerance).
    def ref_bf16(x, p):
        sig = lambda t: 0.5 * (1.0 + jnp.tanh(0.5 * t))
        xb = x.astype(jnp.bfloat16)
        h0 = sig(jnp.dot(xb, p["wg"], preferred_element_type=jnp.float32) + p["bg"])
        h1 = sig(jnp.dot(h0.astype(jnp.bfloat16), p["wa"],
                         preferred_element_type=jnp.float32) + p["ba"])
        y = jnp.dot(h1.astype(jnp.bfloat16), p["wb"],
                    preferred_element_type=jnp.float32) + p["bb"]
        return y[:, :NUM_CLASSES]

    # Reference 2: original full-f32 semantics (loose tolerance: bf16 weights/output in kernel).
    def ref_f32(x, p):
        h0 = jax.nn.sigmoid(x @ p["wg"] + p["bg"])
        h1 = jax.nn.sigmoid(h0 @ p["wa"] + p["ba"])
        return h1 @ p["wb"] + p["bb"]

    assert jnp.allclose(out, ref_bf16(x, params), atol=2e-2, rtol=2e-2)
    assert jnp.allclose(out, ref_f32(x, raw), atol=5e-2, rtol=5e-2)

    print("KERNEL_OK")
</pallas_src>

<mosaic_0001>
module attributes {stable_mosaic.version = 11 : i64} {
  func.func @_feature_extractor_kernel(%arg0: i32, %arg1: memref<16x32xf32, #tpu.memory_space<vmem>>, %arg2: memref<32x128xbf16, #tpu.memory_space<vmem>>, %arg3: memref<1x128xf32, #tpu.memory_space<vmem>>, %arg4: memref<128x128xbf16, #tpu.memory_space<vmem>>, %arg5: memref<1x128xf32, #tpu.memory_space<vmem>>, %arg6: memref<128x128xbf16, #tpu.memory_space<vmem>>, %arg7: memref<1x128xf32, #tpu.memory_space<vmem>>, %arg8: memref<16x128xbf16, #tpu.memory_space<vmem>>) attributes {dimension_semantics = [#tpu.dimension_semantics<parallel>], iteration_bounds = array<i64: 1>, scalar_prefetch = 0 : i64, scratch_operands = 0 : i64, tpu.core_type = #tpu.core_type<tc>, window_params = [{transform_indices = @transform_0, window_bounds = array<i64: 16, 32>}, {pipeline_mode = #tpu.pipeline_mode<synchronous>, transform_indices = @transform_1, window_bounds = array<i64: 32, 128>}, {pipeline_mode = #tpu.pipeline_mode<synchronous>, transform_indices = @transform_2, window_bounds = array<i64: 1, 128>}, {pipeline_mode = #tpu.pipeline_mode<synchronous>, transform_indices = @transform_3, window_bounds = array<i64: 128, 128>}, {pipeline_mode = #tpu.pipeline_mode<synchronous>, transform_indices = @transform_4, window_bounds = array<i64: 1, 128>}, {pipeline_mode = #tpu.pipeline_mode<synchronous>, transform_indices = @transform_5, window_bounds = array<i64: 128, 128>}, {pipeline_mode = #tpu.pipeline_mode<synchronous>, transform_indices = @transform_6, window_bounds = array<i64: 1, 128>}, {transform_indices = @transform_7, window_bounds = array<i64: 16, 128>}]} {
    %c0 = arith.constant 0 : index
    %c0_0 = arith.constant 0 : index
    %0 = vector.load %arg1[%c0, %c0_0] : memref<16x32xf32, #tpu.memory_space<vmem>>, vector<16x32xf32>
    %1 = arith.truncf %0 : vector<16x32xf32> to vector<16x32xbf16>
    %c0_1 = arith.constant 0 : index
    %c0_2 = arith.constant 0 : index
    %2 = vector.load %arg2[%c0_1, %c0_2] : memref<32x128xbf16, #tpu.memory_space<vmem>>, vector<32x128xbf16>
    %cst = arith.constant dense<0.000000e+00> : vector<16x128xf32>
    %3 = tpu.matmul %1, %2, %cst {dimension_numbers = #tpu.dot_dimension_numbers<[1], [0], [0], [1], [0, 0, 1, 1], [], []>} : vector<16x32xbf16>, vector<32x128xbf16>, vector<16x128xf32> -> vector<16x128xf32>
    %c0_3 = arith.constant 0 : index
    %c0_4 = arith.constant 0 : index
    %4 = vector.load %arg3[%c0_3, %c0_4] : memref<1x128xf32, #tpu.memory_space<vmem>>, vector<1x128xf32>
    %5 = vector.broadcast %4 : vector<1x128xf32> to vector<16x128xf32>
    %6 = arith.addf %3, %5 : vector<16x128xf32>
    %cst_5 = arith.constant 5.000000e-01 : f32
    %7 = vector.broadcast %cst_5 : f32 to vector<16x128xf32>
    %8 = arith.mulf %7, %6 : vector<16x128xf32>
    %9 = math.tanh %8 : vector<16x128xf32>
    %cst_6 = arith.constant 1.000000e+00 : f32
    %10 = vector.broadcast %cst_6 : f32 to vector<16x128xf32>
    %11 = arith.addf %10, %9 : vector<16x128xf32>
    %cst_7 = arith.constant 5.000000e-01 : f32
    %12 = vector.broadcast %cst_7 : f32 to vector<16x128xf32>
    %13 = arith.mulf %12, %11 : vector<16x128xf32>
    %14 = arith.truncf %13 : vector<16x128xf32> to vector<16x128xbf16>
    %c0_8 = arith.constant 0 : index
    %c0_9 = arith.constant 0 : index
    %15 = vector.load %arg4[%c0_8, %c0_9] : memref<128x128xbf16, #tpu.memory_space<vmem>>, vector<128x128xbf16>
    %cst_10 = arith.constant dense<0.000000e+00> : vector<16x128xf32>
    %16 = tpu.matmul %14, %15, %cst_10 {dimension_numbers = #tpu.dot_dimension_numbers<[1], [0], [0], [1], [0, 0, 1, 1], [], []>} : vector<16x128xbf16>, vector<128x128xbf16>, vector<16x128xf32> -> vector<16x128xf32>
    %c0_11 = arith.constant 0 : index
    %c0_12 = arith.constant 0 : index
    %17 = vector.load %arg5[%c0_11, %c0_12] : memref<1x128xf32, #tpu.memory_space<vmem>>, vector<1x128xf32>
    %18 = vector.broadcast %17 : vector<1x128xf32> to vector<16x128xf32>
    %19 = arith.addf %16, %18 : vector<16x128xf32>
    %cst_13 = arith.constant 5.000000e-01 : f32
    %20 = vector.broadcast %cst_13 : f32 to vector<16x128xf32>
    %21 = arith.mulf %20, %19 : vector<16x128xf32>
    %22 = math.tanh %21 : vector<16x128xf32>
    %cst_14 = arith.constant 1.000000e+00 : f32
    %23 = vector.broadcast %cst_14 : f32 to vector<16x128xf32>
    %24 = arith.addf %23, %22 : vector<16x128xf32>
    %cst_15 = arith.constant 5.000000e-01 : f32
    %25 = vector.broadcast %cst_15 : f32 to vector<16x128xf32>
    %26 = arith.mulf %25, %24 : vector<16x128xf32>
    %27 = arith.truncf %26 : vector<16x128xf32> to vector<16x128xbf16>
    %c0_16 = arith.constant 0 : index
    %c0_17 = arith.constant 0 : index
    %28 = vector.load %arg6[%c0_16, %c0_17] : memref<128x128xbf16, #tpu.memory_space<vmem>>, vector<128x128xbf16>
    %cst_18 = arith.constant dense<0.000000e+00> : vector<16x128xf32>
    %29 = tpu.matmul %27, %28, %cst_18 {dimension_numbers = #tpu.dot_dimension_numbers<[1], [0], [0], [1], [0, 0, 1, 1], [], []>} : vector<16x128xbf16>, vector<128x128xbf16>, vector<16x128xf32> -> vector<16x128xf32>
    %c0_19 = arith.constant 0 : index
    %c0_20 = arith.constant 0 : index
    %30 = vector.load %arg7[%c0_19, %c0_20] : memref<1x128xf32, #tpu.memory_space<vmem>>, vector<1x128xf32>
    %31 = vector.broadcast %30 : vector<1x128xf32> to vector<16x128xf32>
    %32 = arith.addf %29, %31 : vector<16x128xf32>
    %33 = arith.truncf %32 : vector<16x128xf32> to vector<16x128xbf16>
    %c0_21 = arith.constant 0 : index
    %c0_22 = arith.constant 0 : index
    %34 = vector.load %arg8[%c0_21, %c0_22] : memref<16x128xbf16, #tpu.memory_space<vmem>>, vector<16x128xbf16>
    tpu.vector_store %arg8[%c0_21, %c0_22], %33 {strides = array<i32>} : memref<16x128xbf16, #tpu.memory_space<vmem>>, vector<16x128xbf16>,
    return
  }
  func.func @transform_0(%arg0: i32) -> (i32, i32) {
    %c0_i32 = arith.constant 0 : i32
    %c0_i32_0 = arith.constant 0 : i32
    return %arg0, %c0_i32 : i32, i32
  }
  func.func @transform_1(%arg0: i32) -> (i32, i32) {
    %c0_i32 = arith.constant 0 : i32
    %c0_i32_0 = arith.constant 0 : i32
    %c0_i32_1 = arith.constant 0 : i32
    return %c0_i32, %c0_i32_0 : i32, i32
  }
  func.func @transform_2(%arg0: i32) -> (i32, i32) {
    %c0_i32 = arith.constant 0 : i32
    %c0_i32_0 = arith.constant 0 : i32
    %c0_i32_1 = arith.constant 0 : i32
    return %c0_i32, %c0_i32_0 : i32, i32
  }
  func.func @transform_3(%arg0: i32) -> (i32, i32) {
    %c0_i32 = arith.constant 0 : i32
    %c0_i32_0 = arith.constant 0 : i32
    %c0_i32_1 = arith.constant 0 : i32
    return %c0_i32, %c0_i32_0 : i32, i32
  }
  func.func @transform_4(%arg0: i32) -> (i32, i32) {
    %c0_i32 = arith.constant 0 : i32
    %c0_i32_0 = arith.constant 0 : i32
    %c0_i32_1 = arith.constant 0 : i32
    return %c0_i32, %c0_i32_0 : i32, i32
  }
  func.func @transform_5(%arg0: i32) -> (i32, i32) {
    %c0_i32 = arith.constant 0 : i32
    %c0_i32_0 = arith.constant 0 : i32
    %c0_i32_1 = arith.constant 0 : i32
    return %c0_i32, %c0_i32_0 : i32, i32
  }
  func.func @transform_6(%arg0: i32) -> (i32, i32) {
    %c0_i32 = arith.constant 0 : i32
    %c0_i32_0 = arith.constant 0 : i32
    %c0_i32_1 = arith.constant 0 : i32
    return %c0_i32, %c0_i32_0 : i32, i32
  }
  func.func @transform_7(%arg0: i32) -> (i32, i32) {
    %c0_i32 = arith.constant 0 : i32
    %c0_i32_0 = arith.constant 0 : i32
    return %arg0, %c0_i32 : i32, i32
  }
}

</mosaic_0001>

<llo_original>
// kernel: feature_extractor_forward.1
$region0: #{feature_extractor_forward.1}
  #allocation0 [shape = 'u32[]', space=smem, size = 0x4, offset = 0x4, fixed_abs, tag = 'smem constant byte address 0x4 - core index']
  #allocation1 [shape = 'u32[144,128]{1,0:T(1,128)}', space=vmem, size = 0x12000, scoped, tag = 'internal scratch']
  %s0 = inlined_call_operand.vmem [shape: f32[16,32], index: 0, kind: input, shape index: {}]
  %s1 = inlined_call_operand.vmem [shape: bf16[32,128], index: 1, kind: input, shape index: {}]
  %s2 = inlined_call_operand.vmem [shape: f32[1,128], index: 2, kind: input, shape index: {}]
  %s3 = inlined_call_operand.hbm [shape: bf16[128,128], index: 3, kind: input, shape index: {}]
  %s4 = inlined_call_operand.vmem [shape: f32[1,128], index: 4, kind: input, shape index: {}]
  %s5 = inlined_call_operand.hbm [shape: bf16[128,128], index: 5, kind: input, shape index: {}]
  %s6 = inlined_call_operand.vmem [shape: f32[1,128], index: 6, kind: input, shape index: {}]
  %s7 = inlined_call_operand.vmem [shape: bf16[16,128], index: 7, kind: output, shape index: {}]
  %s8 = sld [smem:[#allocation0]]
  $region46: #{feature_extractor_forward.1} parent=0
    _
  %s10 = ssub.s32 1, %s8
  %s11 = scalar_select 0, %s10, %s8
  $region1: #{feature_extractor_forward.1} parent=0
    #allocation2 [shape = 'u8[32768]{0}', space=vmem, size = 0x8000, scoped, tag = 'input window, operand 3, single buffered']
    #allocation3 [shape = 's32[1]{0}', space=sflag, size = 0x4, scoped, tag = 'scoped memory for feature_extractor_forward.1']
    #allocation4 [shape = 'u8[32768]{0}', space=vmem, size = 0x8000, scoped, tag = 'input window, operand 5, single buffered']
    #allocation5 [shape = 's32[1]{0}', space=sflag, size = 0x4, scoped, tag = 'scoped memory for feature_extractor_forward.1']
    %12 = vsyncpa [#allocation3], 0
    %13 = vsyncpa [#allocation5], 0
    // Predicated region
    $region2: #{feature_extractor_forward.1} parent=1 // pred_check
      _
    $region3: #{feature_extractor_forward.1} parent=1 // pred_check_branch
      %15 = sbr.rel (0) target = $region5
    $region4: #{feature_extractor_forward.1} parent=1 // pred_region
      _
    $region5: #{feature_extractor_forward.1} parent=1 // pred_fallthru
      _
    // Predicated region
    $region6: #{feature_extractor_forward.1} parent=1 // pred_check
      _
    $region7: #{feature_extractor_forward.1} parent=1 // pred_check_branch
      %17 = sbr.rel (0) target = $region9
    $region8: #{feature_extractor_forward.1} parent=1 // pred_region
      _
    $region9: #{feature_extractor_forward.1} parent=1 // pred_fallthru
      _
    // Predicated region
    $region10: #{feature_extractor_forward.1} parent=1 // pred_check
      _
    $region11: #{feature_extractor_forward.1} parent=1 // pred_check_branch
      %19 = sbr.rel (0) target = $region13
    $region12: #{feature_extractor_forward.1} parent=1 // pred_region
      _
    $region13: #{feature_extractor_forward.1} parent=1 // pred_fallthru
      _
    // Predicated region
    $region14: #{feature_extractor_forward.1} parent=1 // pred_check
      _
    $region15: #{feature_extractor_forward.1} parent=1 // pred_check_branch
      %21 = sbr.rel (0) target = $region17
    $region16: #{feature_extractor_forward.1} parent=1 // pred_region
      %s23 = ssub.s32 1024, 1024
      %24 = vsyncadd [#allocation3], %s23
      %s25 = sshll.u32 [#allocation2], 4
      %s26 = int_to_ptr.vmem [resolvable:$true] %s25
      %31 = dma.hbm_to_vmem [thread:$0]  %s3, 1024, %s26, [#allocation3], 64, 64, 4
    $region17: #{feature_extractor_forward.1} parent=1 // pred_fallthru
      _
    // Predicated region
    $region18: #{feature_extractor_forward.1} parent=1 // pred_check
      _
    $region19: #{feature_extractor_forward.1} parent=1 // pred_check_branch
      %33 = sbr.rel (0) target = $region21
    $region20: #{feature_extractor_forward.1} parent=1 // pred_region
      _
    $region21: #{feature_extractor_forward.1} parent=1 // pred_fallthru
      _
    // Predicated region
    $region22: #{feature_extractor_forward.1} parent=1 // pred_check
      _
    $region23: #{feature_extractor_forward.1} parent=1 // pred_check_branch
      %35 = sbr.rel (0) target = $region25
    $region24: #{feature_extractor_forward.1} parent=1 // pred_region
      %s37 = ssub.s32 1024, 1024
      %38 = vsyncadd [#allocation5], %s37
      %s39 = sshll.u32 [#allocation4], 4
      %s40 = int_to_ptr.vmem [resolvable:$true] %s39
      %45 = dma.hbm_to_vmem [thread:$0]  %s5, 1024, %s40, [#allocation5], 64, 64, 4
    $region25: #{feature_extractor_forward.1} parent=1 // pred_fallthru
      _
    // Predicated region
    $region26: #{feature_extractor_forward.1} parent=1 // pred_check
      _
    $region27: #{feature_extractor_forward.1} parent=1 // pred_check_branch
      %47 = sbr.rel (0) target = $region29
    $region28: #{feature_extractor_forward.1} parent=1 // pred_region
      _
    $region29: #{feature_extractor_forward.1} parent=1 // pred_fallthru
      _
    // Predicated region
    $region30: #{feature_extractor_forward.1} parent=1 // pred_check
      _
    $region31: #{feature_extractor_forward.1} parent=1 // pred_check_branch
      %49 = sbr.rel (0) target = $region33
    $region32: #{feature_extractor_forward.1} parent=1 // pred_region
      %50 = dma.done [#allocation3], 1024
    $region33: #{feature_extractor_forward.1} parent=1 // pred_fallthru
      _
    // Predicated region
    $region34: #{feature_extractor_forward.1} parent=1 // pred_check
      _
    $region35: #{feature_extractor_forward.1} parent=1 // pred_check_branch
      %52 = sbr.rel (0) target = $region37
    $region36: #{feature_extractor_forward.1} parent=1 // pred_region
      %53 = dma.done [#allocation5], 1024
    $region37: #{feature_extractor_forward.1} parent=1 // pred_fallthru
      _
    %v55 = vld [vmem:[%s0] sm:$0xff]
    %v56 = vld [vmem:[%s0 + $0x8] sm:$0xff]
    %v57 = vpack.c.bf16 %v56, %v55
    %v58 = vld [vmem:[%s1] sm:$0xf]
    %v59 = vld [vmem:[%s1 + $0x4] sm:$0xf]
    %v60 = vld [vmem:[%s1 + $0x8] sm:$0xf]
    %v61 = vld [vmem:[%s1 + $0xc] sm:$0xf]
    %v62 = vld [vmem:[%s2] sm:$0x1]
    %v64 = vlaneseq
    %v65 = vshrl.u32 %v64, 7
    %v66 = vsub.s32 0, %v65
    %v67 = vrot.slane %v62, %v66
    %v73 = vunpack.c.l.b16 %v58
    %v74 = vunpack.c.l.b16 %v59
    %v75 = vunpack.c.l.b16 %v60
    %v76 = vunpack.c.l.b16 %v61
    %v77 = vpack.c.b16 %v74, %v73
    %v78 = vpack.c.b16 %v76, %v75
    %vm81 = vcmask 261120
    %v83 = vsel %vm81, %v57, 0
    %85 = vmatprep.subr.bf16.mxu0 0
    %86 = vmatpush1.bf16.msra.mxu0 %v77
    %87 = vmatprep.subr.bf16.mxu0 0
    %88 = vmatpush1.bf16.msra.mxu0 %v78
    %89 = vmatprep.subr.bf16.mxu0 0
    %90 = vmatpush1.bf16.msra.mxu0 0
    %91 = vmatprep.subr.bf16.mxu0 0
    %92 = vmatpush1.bf16.msra.mxu0 0
    %93 = vmatprep.subr.bf16.mxu0 0
    %94 = vmatpush1.bf16.msra.mxu0 0
    %95 = vmatprep.subr.bf16.mxu0 0
    %96 = vmatpush1.bf16.msra.mxu0 0
    %97 = vmatprep.subr.bf16.mxu0 0
    %98 = vmatpush1.bf16.msra.mxu0 0
    %99 = vmatprep.subr.bf16.mxu0 0
    %100 = vmatpush1.bf16.msra.mxu0 0
    %101 = vmatprep.subr.bf16.mxu0 0
    %102 = vmatpush1.bf16.msra.mxu0 0
    %103 = vmatprep.subr.bf16.mxu0 0
    %104 = vmatpush1.bf16.msra.mxu0 0
    %105 = vmatprep.subr.bf16.mxu0 0
    %106 = vmatpush1.bf16.msra.mxu0 0
    %107 = vmatprep.subr.bf16.mxu0 0
    %108 = vmatpush1.bf16.msra.mxu0 0
    %109 = vmatprep.subr.bf16.mxu0 0
    %110 = vmatpush1.bf16.msra.mxu0 0
    %111 = vmatprep.subr.bf16.mxu0 0
    %112 = vmatpush1.bf16.msra.mxu0 0
    %113 = vmatprep.subr.bf16.mxu0 0
    %114 = vmatpush1.bf16.msra.mxu0 0
    %115 = vmatprep.subr.bf16.mxu0 0
    %116 = vmatpush1.bf16.msra.mxu0 0
    %117 = vmatprep.mubr.bf16.mxu0 0
    %118 = vmatmul.mubr.bf16.gmra.mrb[0].mxu0 %v83
    %v119 = vpop.f32.mrb[0].mxu0
    %v120 = vadd.f32 %v67, %v119
    %v121 = vpop.f32.mrb[0].mxu0
    %v122 = vpop.f32.mrb[0].mxu0
    %v123 = vadd.f32 %v67, %v122
    %v124 = vpop.f32.mrb[0].mxu0
    %125 = vdwg.mxu0
    %v126 = vmul.f32 %v120, 0.5
    %v127 = vmul.f32 %v123, 0.5
    %v128 = vtanh.pop %v126
    %v129 = vtanh.pop %v127
    %v130 = vadd.f32 %v128, 1.0
    %v131 = vadd.f32 %v129, 1.0
    %v132 = vmul.f32 %v130, 0.5
    %v133 = vmul.f32 %v131, 0.5
    %v134 = vpack.c.bf16 %v133, %v132
    %v135 = vld [vmem:[#allocation2] sm:$0xf]
    %v136 = vld [vmem:[#allocation2 + $0x4] sm:$0xf]
    %v137 = vld [vmem:[#allocation2 + $0x8] sm:$0xf]
    %v138 = vld [vmem:[#allocation2 + $0xc] sm:$0xf]
    %v139 = vld [vmem:[#allocation2 + $0x10] sm:$0xf]
    %v140 = vld [vmem:[#allocation2 + $0x14] sm:$0xf]
    %v141 = vld [vmem:[#allocation2 + $0x18] sm:$0xf]
    %v142 = vld [vmem:[#allocation2 + $0x1c] sm:$0xf]
    %v143 = vld [vmem:[#allocation2 + $0x20] sm:$0xf]
    %v144 = vld [vmem:[#allocation2 + $0x24] sm:$0xf]
    %v145 = vld [vmem:[#allocation2 + $0x28] sm:$0xf]
    %v146 = vld [vmem:[#allocation2 + $0x2c] sm:$0xf]
    %v147 = vld [vmem:[#allocation2 + $0x30] sm:$0xf]
    %v148 = vld [vmem:[#allocation2 + $0x34] sm:$0xf]
    %v149 = vld [vmem:[#allocation2 + $0x38] sm:$0xf]
    %v150 = vld [vmem:[#allocation2 + $0x3c] sm:$0xf]
    %v151 = vld [vmem:[%s4] sm:$0x1]
    %v153 = vlaneseq
    %v154 = vshrl.u32 %v153, 7
    %v155 = vsub.s32 0, %v154
    %v156 = vrot.slane %v151, %v155
    %v174 = vunpack.c.l.b16 %v135
    %v175 = vunpack.c.l.b16 %v136
    %v176 = vunpack.c.l.b16 %v137
    %v177 = vunpack.c.l.b16 %v138
    %v178 = vunpack.c.l.b16 %v139
    %v179 = vunpack.c.l.b16 %v140
    %v180 = vunpack.c.l.b16 %v141
    %v181 = vunpack.c.l.b16 %v142
    %v182 = vunpack.c.l.b16 %v143
    %v183 = vunpack.c.l.b16 %v144
    %v184 = vunpack.c.l.b16 %v145
    %v185 = vunpack.c.l.b16 %v146
    %v186 = vunpack.c.l.b16 %v147
    %v187 = vunpack.c.l.b16 %v148
    %v188 = vunpack.c.l.b16 %v149
    %v189 = vunpack.c.l.b16 %v150
    %v190 = vpack.c.b16 %v175, %v174
    %v191 = vpack.c.b16 %v177, %v176
    %v192 = vpack.c.b16 %v179, %v178
    %v193 = vpack.c.b16 %v181, %v180
    %v194 = vpack.c.b16 %v183, %v182
    %v195 = vpack.c.b16 %v185, %v184
    %v196 = vpack.c.b16 %v187, %v186
    %v197 = vpack.c.b16 %v189, %v188
    %206 = vmatprep.subr.bf16.mxu0 0
    %207 = vmatpush1.bf16.msra.mxu0 %v190
    %208 = vmatprep.subr.bf16.mxu0 0
    %209 = vmatpush1.bf16.msra.mxu0 %v191
    %210 = vmatprep.subr.bf16.mxu0 0
    %211 = vmatpush1.bf16.msra.mxu0 %v192
    %212 = vmatprep.subr.bf16.mxu0 0
    %213 = vmatpush1.bf16.msra.mxu0 %v193
    %214 = vmatprep.subr.bf16.mxu0 0
    %215 = vmatpush1.bf16.msra.mxu0 %v194
    %216 = vmatprep.subr.bf16.mxu0 0
    %217 = vmatpush1.bf16.msra.mxu0 %v195
    %218 = vmatprep.subr.bf16.mxu0 0
    %219 = vmatpush1.bf16.msra.mxu0 %v196
    %220 = vmatprep.subr.bf16.mxu0 0
    %221 = vmatpush1.bf16.msra.mxu0 %v197
    %222 = vmatprep.subr.bf16.mxu0 0
    %223 = vmatpush1.bf16.msra.mxu0 0
    %224 = vmatprep.subr.bf16.mxu0 0
    %225 = vmatpush1.bf16.msra.mxu0 0
    %226 = vmatprep.subr.bf16.mxu0 0
    %227 = vmatpush1.bf16.msra.mxu0 0
    %228 = vmatprep.subr.bf16.mxu0 0
    %229 = vmatpush1.bf16.msra.mxu0 0
    %230 = vmatprep.subr.bf16.mxu0 0
    %231 = vmatpush1.bf16.msra.mxu0 0
    %232 = vmatprep.subr.bf16.mxu0 0
    %233 = vmatpush1.bf16.msra.mxu0 0
    %234 = vmatprep.subr.bf16.mxu0 0
    %235 = vmatpush1.bf16.msra.mxu0 0
    %236 = vmatprep.subr.bf16.mxu0 0
    %237 = vmatpush1.bf16.msra.mxu0 0
    %238 = vmatprep.mubr.bf16.mxu0 0
    %239 = vmatmul.mubr.bf16.gmra.mrb[0].mxu0 %v134
    %v240 = vpop.f32.mrb[0].mxu0
    %v241 = vadd.f32 %v156, %v240
    %v242 = vpop.f32.mrb[0].mxu0
    %v243 = vpop.f32.mrb[0].mxu0
    %v244 = vadd.f32 %v156, %v243
    %v245 = vpop.f32.mrb[0].mxu0
    %246 = vdwg.mxu0
    %v247 = vmul.f32 %v241, 0.5
    %v248 = vmul.f32 %v244, 0.5
    %v249 = vtanh.pop %v247
    %v250 = vtanh.pop %v248
    %v251 = vadd.f32 %v249, 1.0
    %v252 = vadd.f32 %v250, 1.0
    %v253 = vmul.f32 %v251, 0.5
    %v254 = vmul.f32 %v252, 0.5
    %v255 = vpack.c.bf16 %v254, %v253
    %v256 = vld [vmem:[#allocation4] sm:$0xf]
    %v257 = vld [vmem:[#allocation4 + $0x4] sm:$0xf]
    %v258 = vld [vmem:[#allocation4 + $0x8] sm:$0xf]
    %v259 = vld [vmem:[#allocation4 + $0xc] sm:$0xf]
    %v260 = vld [vmem:[#allocation4 + $0x10] sm:$0xf]
    %v261 = vld [vmem:[#allocation4 + $0x14] sm:$0xf]
    %v262 = vld [vmem:[#allocation4 + $0x18] sm:$0xf]
    %v263 = vld [vmem:[#allocation4 + $0x1c] sm:$0xf]
    %v264 = vld [vmem:[#allocation4 + $0x20] sm:$0xf]
    %v265 = vld [vmem:[#allocation4 + $0x24] sm:$0xf]
    %v266 = vld [vmem:[#allocation4 + $0x28] sm:$0xf]
    %v267 = vld [vmem:[#allocation4 + $0x2c] sm:$0xf]
    %v268 = vld [vmem:[#allocation4 + $0x30] sm:$0xf]
    %v269 = vld [vmem:[#allocation4 + $0x34] sm:$0xf]
    %v270 = vld [vmem:[#allocation4 + $0x38] sm:$0xf]
    %v271 = vld [vmem:[#allocation4 + $0x3c] sm:$0xf]
    %v272 = vld [vmem:[%s6] sm:$0x1]
    %v274 = vlaneseq
    %v275 = vshrl.u32 %v274, 7
    %v276 = vsub.s32 0, %v275
    %v277 = vrot.slane %v272, %v276
    %v295 = vunpack.c.l.b16 %v256
    %v296 = vunpack.c.l.b16 %v257
    %v297 = vunpack.c.l.b16 %v258
    %v298 = vunpack.c.l.b16 %v259
    %v299 = vunpack.c.l.b16 %v260
    %v300 = vunpack.c.l.b16 %v261
    %v301 = vunpack.c.l.b16 %v262
    %v302 = vunpack.c.l.b16 %v263
    %v303 = vunpack.c.l.b16 %v264
    %v304 = vunpack.c.l.b16 %v265
    %v305 = vunpack.c.l.b16 %v266
    %v306 = vunpack.c.l.b16 %v267
    %v307 = vunpack.c.l.b16 %v268
    %v308 = vunpack.c.l.b16 %v269
    %v309 = vunpack.c.l.b16 %v270
    %v310 = vunpack.c.l.b16 %v271
    %v311 = vpack.c.b16 %v296, %v295
    %v312 = vpack.c.b16 %v298, %v297
    %v313 = vpack.c.b16 %v300, %v299
    %v314 = vpack.c.b16 %v302, %v301
    %v315 = vpack.c.b16 %v304, %v303
    %v316 = vpack.c.b16 %v306, %v305
    %v317 = vpack.c.b16 %v308, %v307
    %v318 = vpack.c.b16 %v310, %v309
    %327 = vmatprep.subr.bf16.mxu0 0
    %328 = vmatpush1.bf16.msra.mxu0 %v311
    %329 = vmatprep.subr.bf16.mxu0 0
    %330 = vmatpush1.bf16.msra.mxu0 %v312
    %331 = vmatprep.subr.bf16.mxu0 0
    %332 = vmatpush1.bf16.msra.mxu0 %v313
    %333 = vmatprep.subr.bf16.mxu0 0
    %334 = vmatpush1.bf16.msra.mxu0 %v314
    %335 = vmatprep.subr.bf16.mxu0 0
    %336 = vmatpush1.bf16.msra.mxu0 %v315
    %337 = vmatprep.subr.bf16.mxu0 0
    %338 = vmatpush1.bf16.msra.mxu0 %v316
    %339 = vmatprep.subr.bf16.mxu0 0
    %340 = vmatpush1.bf16.msra.mxu0 %v317
    %341 = vmatprep.subr.bf16.mxu0 0
    %342 = vmatpush1.bf16.msra.mxu0 %v318
    %343 = vmatprep.subr.bf16.mxu0 0
    %344 = vmatpush1.bf16.msra.mxu0 0
    %345 = vmatprep.subr.bf16.mxu0 0
    %346 = vmatpush1.bf16.msra.mxu0 0
    %347 = vmatprep.subr.bf16.mxu0 0
    %348 = vmatpush1.bf16.msra.mxu0 0
    %349 = vmatprep.subr.bf16.mxu0 0
    %350 = vmatpush1.bf16.msra.mxu0 0
    %351 = vmatprep.subr.bf16.mxu0 0
    %352 = vmatpush1.bf16.msra.mxu0 0
    %353 = vmatprep.subr.bf16.mxu0 0
    %354 = vmatpush1.bf16.msra.mxu0 0
    %355 = vmatprep.subr.bf16.mxu0 0
    %356 = vmatpush1.bf16.msra.mxu0 0
    %357 = vmatprep.subr.bf16.mxu0 0
    %358 = vmatpush1.bf16.msra.mxu0 0
    %359 = vmatprep.mubr.bf16.mxu0 0
    %360 = vmatmul.mubr.bf16.gmra.mrb[0].mxu0 %v255
    %v361 = vpop.f32.mrb[0].mxu0
    %v362 = vadd.f32 %v277, %v361
    %v363 = vpop.f32.mrb[0].mxu0
    %v364 = vpop.f32.mrb[0].mxu0
    %v365 = vadd.f32 %v277, %v364
    %v366 = vpop.f32.mrb[0].mxu0
    %367 = vdwg.mxu0
    %v368 = vpack.c.bf16 %v365, %v362
    %v370 = vunpack.c.l.b16 %v368
    %v371 = vunpack.c.h.b16 %v368
    %v372 = vpack.c.b16 %v370, %v370
    %v373 = vpack.c.b16 %v371, %v371
    %376 = vst [vmem:[%s7] sm:$0xf] %v372
    %377 = vst [vmem:[%s7 + $0x4] sm:$0xf] %v373
    // Predicated region
    $region38: #{feature_extractor_forward.1} parent=1 // pred_check
      _
    $region39: #{feature_extractor_forward.1} parent=1 // pred_check_branch
      %379 = sbr.rel (0) target = $region41
    $region40: #{feature_extractor_forward.1} parent=1 // pred_region
      _
    $region41: #{feature_extractor_forward.1} parent=1 // pred_fallthru
      _
    // Predicated region
    $region42: #{feature_extractor_forward.1} parent=1 // pred_check
      _
    $region43: #{feature_extractor_forward.1} parent=1 // pred_check_branch
      %381 = sbr.rel (0) target = $region45
    $region44: #{feature_extractor_forward.1} parent=1 // pred_region
      _
    $region45: #{feature_extractor_forward.1} parent=1 // pred_fallthru
      _
    %382 = vsyncpa [#allocation3], 1
    %383 = vsyncpa [#allocation5], 1

</llo_original>
